<compile_context>
chip_gen: v7x
topology: tpu7x:2x2x1
jax: 0.10.0
libtpu: 0.0.40
codegen_flags: <defaults>
</compile_context>

<pallas_src>
import jax
import jax.numpy as jnp
from jax.experimental import pallas as pl
from jax.experimental.pallas import tpu as pltpu


def _round_up(x, m):
    return (x + m - 1) // m * m


def _auto_block_b(batch):
    if batch < 16:
        return _round_up(batch, 8)
    # At least 2 grid steps so both v7x TensorCores get work; cap the tile at
    # 256 rows (extra steps cost ~0.35 us each on single-TC v5e/v6e -- noise).
    blk = _round_up((batch + 1) // 2, 8)
    return min(blk, 256)


def _vmem_limit_bytes():
    """Generation-aware VMEM limit: ~75% of physical capacity."""
    try:
        info = pltpu.get_tpu_info()
        cap = getattr(info, "vmem_capacity_bytes", None)
        if cap:
            return max(32 * 1024 * 1024, (int(cap) * 3) // 4)
    except Exception:
        pass
    return 48 * 1024 * 1024   # safe on every generation (v7x has 64 MiB/TC)


def _choose_block_k(k_pad, ep, blk, rh_itemsize, w_itemsize, vmem_limit):
    """Largest 128-multiple K-chunk that keeps the pipeline well under VMEM."""
    # Resident regardless of tk: double-buffered out tiles + f32 accumulator.
    fixed = 3 * blk * ep * 4
    budget = max(vmem_limit // 2 - fixed, 512 * 1024)
    per_tk = 2 * blk * rh_itemsize + 2 * ep * w_itemsize   # 2x rh + 2x W2 rows
    tk = (budget // per_tk) // 128 * 128
    return max(128, min(k_pad, tk))


def core_tucker_kernel(rh_ref, w_ref, bn1s_ref, alpha_ref, out_ref, acc_ref):
    # rh_ref:    (TB, TK)      rh[b, k*E+i] = r[b,k] * bn0(h)[b,i]   (K-chunk)
    # w_ref:     (TK, Ep)      W2[k*E+i, j] = W[k,i,j] * bn1_scale[j] (K-chunk)
    # bn1s_ref:  (1, Ep)       bn1 shift (scale already folded into W2)
    # alpha_ref: (1, 1) SMEM   PReLU slope (single shared parameter)
    # acc_ref:   (TB, Ep) f32  VMEM accumulator across the K grid axis
    kk = pl.program_id(1)

    @pl.when(kk == 0)
    def _():
        acc_ref[...] = jnp.zeros_like(acc_ref)

    # Single deep-K MXU matmul; f32 accumulation.
    acc_ref[...] += jnp.dot(rh_ref[...], w_ref[...],
                            preferred_element_type=jnp.float32)

    @pl.when(kk == pl.num_programs(1) - 1)
    def _():
        # TODO(synk): hidden_dropout1 / hidden_dropout2 are identity here (eval
        # mode); PyTorch training-mode stochastic masks are not reproduced.
        t = acc_ref[...] + bn1s_ref[...]
        alpha = alpha_ref[0, 0]
        out_ref[...] = jnp.where(t >= 0.0, t, alpha * t).astype(out_ref.dtype)


def core_tucker_forward(h, r, W, bn0_scale_shift, bn1_scale_shift, prelu_alpha,
                        *, block_b=None, block_k=None,
                        compute_dtype=jnp.bfloat16):
    """Eval-mode CoreTuckER forward. bn*_scale_shift are (2, E) = (scale, shift)."""
    B, E = h.shape
    R = r.shape[1]
    assert W.shape == (R, E, E)

    f32 = jnp.float32
    Ep = _round_up(E, 128)                       # lane-dense output / MXU N dim
    blk = block_b if block_b is not None else _auto_block_b(B)
    B_pad = _round_up(B, blk)

    K = R * E                                    # contraction depth (no per-relation padding)
    itemsize = jnp.dtype(compute_dtype).itemsize
    vmem_limit = _vmem_limit_bytes()
    if block_k is None:
        tk = _choose_block_k(_round_up(K, 128), Ep, blk, itemsize, itemsize,
                             vmem_limit)
    else:
        tk = max(128, _round_up(block_k, 128))
    Kp = _round_up(K, tk)
    n_k = Kp // tk

    bn0 = jnp.asarray(bn0_scale_shift, f32)
    bn1 = jnp.asarray(bn1_scale_shift, f32)

    # bn0 (eval mode) + r x h' outer product in the wrapper (cheap VPU work);
    # the kernel then runs a single deep-K MXU contraction.
    hb = jnp.asarray(h, f32) * bn0[0] + bn0[1]                  # (B, E)
    rh = (jnp.asarray(r, f32)[:, :, None] * hb[:, None, :])     # (B, R, E)
    rh = rh.reshape(B, K)
    rh = jnp.pad(rh, ((0, B_pad - B), (0, Kp - K))).astype(compute_dtype)

    # Fold bn1's scale into W's output axis; lay W out as (K, Ep) with
    # row index k*E + i so the kernel needs exactly one matmul.
    Wf = jnp.asarray(W, f32) * bn1[0][None, None, :]            # (R, E, E)
    W2 = Wf.reshape(K, E)
    W2 = jnp.pad(W2, ((0, Kp - K), (0, Ep - E))).astype(compute_dtype)
    # TODO(synk): optional fp8(e4m3) W2 path with per-tensor scale for v7x.

    bn1_shift = jnp.pad(bn1[1:2, :], ((0, 0), (0, Ep - E)))     # (1, Ep)
    alpha = jnp.asarray(prelu_alpha, f32).reshape(1, 1)

    cost = pl.CostEstimate(
        flops=2 * B_pad * Kp * Ep,
        transcendentals=0,
        bytes_accessed=int(rh.size) * itemsize + int(W2.size) * itemsize
                       + B_pad * Ep * 4)

    out = pl.pallas_call(
        core_tucker_kernel,
        out_shape=jax.ShapeDtypeStruct((B_pad, Ep), f32),
        grid=(B_pad // blk, n_k),
        in_specs=[
            pl.BlockSpec((blk, tk), lambda b, k: (b, k)),        # rh tile
            pl.BlockSpec((tk, Ep), lambda b, k: (k, 0)),         # W2 K-chunk
            pl.BlockSpec((1, Ep), lambda b, k: (0, 0)),          # bn1 shift
            pl.BlockSpec(memory_space=pltpu.MemorySpace.SMEM),   # prelu alpha
        ],
        out_specs=pl.BlockSpec((blk, Ep), lambda b, k: (b, 0)),
        scratch_shapes=[pltpu.VMEM((blk, Ep), jnp.float32)],
        compiler_params=pltpu.CompilerParams(
            dimension_semantics=("parallel", "arbitrary"),
            vmem_limit_bytes=vmem_limit),
        cost_estimate=cost,
    )(rh, W2, bn1_shift, alpha)

    return out[:B, :E]


def core_tucker_ref(h, r, W, bn0, bn1, alpha):
    """Pure-JAX reference mirroring the PyTorch forward (eval mode)."""
    B, E = h.shape
    R = r.shape[1]
    hb = h * bn0[0] + bn0[1]
    Wr = (r @ W.reshape(R, E * E)).reshape(B, E, E)
    t = jnp.einsum("bi,bij->bj", hb, Wr)
    t = t * bn1[0] + bn1[1]
    return jnp.where(t >= 0.0, t, alpha * t)


def make_bn_scale_shift(kg, kb, km, kv, dim, eps=1e-5):
    gamma = 1.0 + 0.1 * jax.random.normal(kg, (dim,), jnp.float32)
    beta = 0.1 * jax.random.normal(kb, (dim,), jnp.float32)
    running_mean = 0.1 * jax.random.normal(km, (dim,), jnp.float32)
    running_var = jnp.abs(1.0 + 0.1 * jax.random.normal(kv, (dim,), jnp.float32))
    scale = gamma / jnp.sqrt(running_var + eps)
    shift = beta - running_mean * scale
    return jnp.stack([scale, shift]).astype(jnp.float32)  # (2, dim)


if __name__ == "__main__":
    B, E, R = 16, 32, 16   # batch, entity_dim, relation_dim

    key = jax.random.PRNGKey(0)
    keys = jax.random.split(key, 11)

    h = jax.random.normal(keys[0], (B, E), jnp.float32)
    r = jax.random.normal(keys[1], (B, R), jnp.float32)
    # W ~ Uniform(-0.01, 0.01) as in the module's __init__
    W = jax.random.uniform(keys[2], (R, E, E), jnp.float32, -0.01, 0.01)

    bn0 = make_bn_scale_shift(keys[3], keys[4], keys[5], keys[6], E)
    bn1 = make_bn_scale_shift(keys[7], keys[8], keys[9], keys[10], E)
    prelu_alpha = 0.25  # nn.PReLU() default init

    ref = core_tucker_ref(h, r, W, bn0, bn1, prelu_alpha)

    # Default path: bf16 W2 / rh (native MXU rate on all generations).
    out = jax.block_until_ready(core_tucker_forward(h, r, W, bn0, bn1,
                                                    prelu_alpha))
    assert out.shape == (B, E) and out.dtype == jnp.float32
    assert jnp.allclose(out, ref, rtol=5e-2, atol=2e-2), (
        f"bf16 max abs err {jnp.max(jnp.abs(out - ref))}")

    # f32 compute path: tight check against the pure-JAX reference.
    out_f32 = jax.block_until_ready(
        core_tucker_forward(h, r, W, bn0, bn1, prelu_alpha,
                            compute_dtype=jnp.float32))
    assert jnp.allclose(out_f32, ref, rtol=1e-4, atol=1e-5), (
        f"f32 max abs err {jnp.max(jnp.abs(out_f32 - ref))}")

    # Exercise the K-tiled accumulation path (multiple 'arbitrary' grid steps).
    out_kt = jax.block_until_ready(
        core_tucker_forward(h, r, W, bn0, bn1, prelu_alpha,
                            compute_dtype=jnp.float32, block_k=128))
    assert jnp.allclose(out_kt, ref, rtol=1e-4, atol=1e-5), (
        f"k-tiled max abs err {jnp.max(jnp.abs(out_kt - ref))}")

    print("KERNEL_OK")
</pallas_src>

<mosaic_0001>
module attributes {stable_mosaic.version = 11 : i64} {
  func.func @core_tucker_kernel(%arg0: i32, %arg1: i32, %arg2: memref<8x512xbf16, #tpu.memory_space<vmem>>, %arg3: memref<512x128xbf16, #tpu.memory_space<vmem>>, %arg4: memref<1x128xf32, #tpu.memory_space<vmem>>, %arg5: memref<1x1xf32, #tpu.memory_space<smem>>, %arg6: memref<8x128xf32, #tpu.memory_space<vmem>>, %arg7: memref<8x128xf32, #tpu.memory_space<vmem>>) attributes {dimension_semantics = [#tpu.dimension_semantics<parallel>, #tpu.dimension_semantics<arbitrary>], iteration_bounds = array<i64: 2, 1>, scalar_prefetch = 0 : i64, scratch_operands = 1 : i64, tpu.core_type = #tpu.core_type<tc>, window_params = [{transform_indices = @transform_0, window_bounds = array<i64: 8, 512>}, {transform_indices = @transform_1, window_bounds = array<i64: 512, 128>}, {pipeline_mode = #tpu.pipeline_mode<synchronous>, transform_indices = @transform_2, window_bounds = array<i64: 1, 128>}, {transform_indices = @transform_3, window_bounds = array<i64: 1, 1>}, {transform_indices = @transform_4, window_bounds = array<i64: 8, 128>}]} {
    %c0_i32 = arith.constant 0 : i32
    %0 = arith.cmpi eq, %arg1, %c0_i32 : i32
    %1 = arith.extui %0 : i1 to i32
    %c0_i32_0 = arith.constant 0 : i32
    %2 = arith.cmpi ne, %1, %c0_i32_0 : i32
    scf.if %2 {
      %cst_10 = arith.constant 0.000000e+00 : f32
      %12 = vector.broadcast %cst_10 : f32 to vector<8x128xf32>
      %c0_11 = arith.constant 0 : index
      %c0_12 = arith.constant 0 : index
      %13 = vector.load %arg7[%c0_11, %c0_12] : memref<8x128xf32, #tpu.memory_space<vmem>>, vector<8x128xf32>
      tpu.vector_store %arg7[%c0_11, %c0_12], %12 {strides = array<i32>} : memref<8x128xf32, #tpu.memory_space<vmem>>, vector<8x128xf32>,
    } else {
    }
    %c0 = arith.constant 0 : index
    %c0_1 = arith.constant 0 : index
    %3 = vector.load %arg7[%c0, %c0_1] : memref<8x128xf32, #tpu.memory_space<vmem>>, vector<8x128xf32>
    %c0_2 = arith.constant 0 : index
    %c0_3 = arith.constant 0 : index
    %4 = vector.load %arg2[%c0_2, %c0_3] : memref<8x512xbf16, #tpu.memory_space<vmem>>, vector<8x512xbf16>
    %c0_4 = arith.constant 0 : index
    %c0_5 = arith.constant 0 : index
    %5 = vector.load %arg3[%c0_4, %c0_5] : memref<512x128xbf16, #tpu.memory_space<vmem>>, vector<512x128xbf16>
    %cst = arith.constant dense<0.000000e+00> : vector<8x128xf32>
    %6 = tpu.matmul %4, %5, %cst {dimension_numbers = #tpu.dot_dimension_numbers<[1], [0], [0], [1], [0, 0, 1, 1], [], []>} : vector<8x512xbf16>, vector<512x128xbf16>, vector<8x128xf32> -> vector<8x128xf32>
    %7 = arith.addf %3, %6 : vector<8x128xf32>
    %c0_6 = arith.constant 0 : index
    %c0_7 = arith.constant 0 : index
    %8 = vector.load %arg7[%c0_6, %c0_7] : memref<8x128xf32, #tpu.memory_space<vmem>>, vector<8x128xf32>
    tpu.vector_store %arg7[%c0_6, %c0_7], %7 {strides = array<i32>} : memref<8x128xf32, #tpu.memory_space<vmem>>, vector<8x128xf32>,
    %c0_i32_8 = arith.constant 0 : i32
    %9 = arith.cmpi eq, %arg1, %c0_i32_8 : i32
    %10 = arith.extui %9 : i1 to i32
    %c0_i32_9 = arith.constant 0 : i32
    %11 = arith.cmpi ne, %10, %c0_i32_9 : i32
    scf.if %11 {
      %c0_10 = arith.constant 0 : index
      %c0_11 = arith.constant 0 : index
      %12 = vector.load %arg7[%c0_10, %c0_11] : memref<8x128xf32, #tpu.memory_space<vmem>>, vector<8x128xf32>
      %c0_12 = arith.constant 0 : index
      %c0_13 = arith.constant 0 : index
      %13 = vector.load %arg4[%c0_12, %c0_13] : memref<1x128xf32, #tpu.memory_space<vmem>>, vector<1x128xf32>
      %14 = vector.broadcast %13 : vector<1x128xf32> to vector<8x128xf32>
      %15 = arith.addf %12, %14 : vector<8x128xf32>
      %c0_14 = arith.constant 0 : index
      %c0_15 = arith.constant 0 : index
      %16 = memref.load %arg5[%c0_14, %c0_15] : memref<1x1xf32, #tpu.memory_space<smem>>
      %cst_16 = arith.constant 0.000000e+00 : f32
      %17 = vector.broadcast %cst_16 : f32 to vector<8x128xf32>
      %18 = arith.cmpf oge, %15, %17 : vector<8x128xf32>
      %19 = vector.broadcast %16 : f32 to vector<8x128xf32>
      %20 = arith.mulf %19, %15 : vector<8x128xf32>
      %21 = arith.select %18, %15, %20 : vector<8x128xi1>, vector<8x128xf32>
      %c0_17 = arith.constant 0 : index
      %c0_18 = arith.constant 0 : index
      %22 = vector.load %arg6[%c0_17, %c0_18] : memref<8x128xf32, #tpu.memory_space<vmem>>, vector<8x128xf32>
      tpu.vector_store %arg6[%c0_17, %c0_18], %21 {strides = array<i32>} : memref<8x128xf32, #tpu.memory_space<vmem>>, vector<8x128xf32>,
    } else {
    }
    return
  }
  func.func @transform_0(%arg0: i32, %arg1: i32) -> (i32, i32) {
    %c0_i32 = arith.constant 0 : i32
    return %arg0, %arg1 : i32, i32
  }
  func.func @transform_1(%arg0: i32, %arg1: i32) -> (i32, i32) {
    %c0_i32 = arith.constant 0 : i32
    %c0_i32_0 = arith.constant 0 : i32
    return %arg1, %c0_i32 : i32, i32
  }
  func.func @transform_2(%arg0: i32, %arg1: i32) -> (i32, i32) {
    %c0_i32 = arith.constant 0 : i32
    %c0_i32_0 = arith.constant 0 : i32
    %c0_i32_1 = arith.constant 0 : i32
    return %c0_i32, %c0_i32_0 : i32, i32
  }
  func.func @transform_3(%arg0: i32, %arg1: i32) -> (i32, i32) {
    %c0_i32 = arith.constant 0 : i32
    %c0_i32_0 = arith.constant 0 : i32
    %c0_i32_1 = arith.constant 0 : i32
    return %c0_i32, %c0_i32_0 : i32, i32
  }
  func.func @transform_4(%arg0: i32, %arg1: i32) -> (i32, i32) {
    %c0_i32 = arith.constant 0 : i32
    %c0_i32_0 = arith.constant 0 : i32
    return %arg0, %c0_i32 : i32, i32
  }
}

</mosaic_0001>

<llo_original>
// kernel: tpu_custom_call.1
$region0: #{tpu_custom_call.1}
  #allocation0 [shape = 'u32[]', space=smem, size = 0x4, offset = 0x4, fixed_abs, tag = 'smem constant byte address 0x4 - core index']
  #allocation1 [shape = 'u32[144,128]{1,0:T(1,128)}', space=vmem, size = 0x12000, scoped, tag = 'internal scratch']
  #allocation2 [shape = 'f32[8,128]{1,0:T(8,128)}', space=vmem, size = 0x1000, scoped, tag = 'scratch operand']
  #allocation3 [shape = 'f32[1,1]{1,0:T(1,128)S(6)}', space=smem, size = 0x200, scoped, tag = 'scoped memory for tpu_custom_call.1']
  %s0 = inlined_call_operand.hbm [shape: bf16[16,512], index: 0, kind: input, shape index: {}]
  %s1 = inlined_call_operand.hbm [shape: bf16[512,128], index: 1, kind: input, shape index: {}]
  %s2 = inlined_call_operand.vmem [shape: f32[1,128], index: 2, kind: input, shape index: {}]
  %s3 = inlined_call_operand.<no memory space> [shape: f32[1,1], index: 3, kind: input, shape index: {}]
  %s4 = inlined_call_operand.hbm [shape: f32[16,128], index: 4, kind: output, shape index: {}]
  %s5 = sld [smem:[#allocation0]]
  $region65: #{tpu_custom_call.1} parent=0
    _
  %s7 = ssub.s32 1, %s5
  %s8 = scalar_select 0, %s7, %s5
  %9 = sst [smem:[#allocation3]] %s3
  $region1: #{tpu_custom_call.1} parent=0
    #allocation4 [shape = 'u8[16384]{0}', space=vmem, size = 0x4000, scoped, tag = 'input window, operand 0']
    #allocation5 [shape = 's32[2]{0}', space=sflag, size = 0x8, scoped, tag = 'scoped memory for tpu_custom_call.1']
    #allocation6 [shape = 's32[2]{0}', space=sflag, size = 0x8, scoped, tag = 'scoped memory for tpu_custom_call.1']
    #allocation7 [shape = 'u8[131072]{0}', space=vmem, size = 0x20000, scoped, tag = 'input window, operand 1, single buffered']
    #allocation8 [shape = 's32[1]{0}', space=sflag, size = 0x4, scoped, tag = 'scoped memory for tpu_custom_call.1']
    #allocation9 [shape = 'u8[8192]{0}', space=vmem, size = 0x2000, scoped, tag = 'output window, operand 0']
    %10 = vsyncpa [#allocation5], 0
    %s11 = scalar_lea.sflag [#allocation5], 1
    %12 = vsyncpa %s11, 0
    %13 = vsyncpa [#allocation8], 0
    %14 = vsyncpa [#allocation6], 0
    %s15 = scalar_lea.sflag [#allocation6], 1
    %16 = vsyncpa %s15, 0
    loop: start=0, step=1, limit=4
    $region2: #{tpu_custom_call.1} parent=1 // loop_pre_header
      _
    $region3: #{tpu_custom_call.1} parent=1 // loop_header
      %s18 = sphi 0, %s22
      %p19 = scmp.ge.s32.totalorder %s18, 4
      %s25 = sphi 0, %s37
      %s26 = sphi 0, %s33
      %s27 = sphi 0, %s25
      %s28 = sphi 0, %s26
      %s29 = sphi 0, %s27
      %s30 = sphi 0, %s28
      %s42 = sphi 0, %s44
      %s45 = sphi 0, %s42
      %s46 = sphi 0, %s45
      %s62 = sphi 0, %s46
      %s68 = sphi 0, %s70
      %s71 = sphi 0, %s68
      %s72 = sphi 0, %s71
      %s88 = sphi 0, %s72
      %s92 = sphi 0, %s92
      %s94 = sphi 0, %s92
      %s95 = sphi 0, %s94
      %s109 = sphi 0, %s95
      %s113 = sphi 0, %s113
      %s115 = sphi 0, %s113
      %s116 = sphi 0, %s115
      %s130 = sphi 0, %s116
      %s136 = sphi 0, %s138
      %s139 = sphi 0, %s136
      %s140 = sphi 0, %s139
      %s156 = sphi 0, %s140
    $region4: #{tpu_custom_call.1} parent=1 // loop_header_branch
      %21 = sbr.rel (%p19) target = $region8
    $region5: #{tpu_custom_call.1} parent=1 // loop_body
      %s23 = ssub.s32 %s18, 1
      %s24 = ssub.s32 %s18, 2
      %s31 = sadd.s32 1, %s26
      %p32 = scmp.ge.s32.totalorder %s31, 1
      %s33 = scalar_select %p32, 0, %s31
      %s34 = sadd.s32 1, %s25
      %s35 = scalar_select %p32, %s34, %s25
      %p36 = scmp.ge.s32.totalorder %s35, 2
      %s37 = scalar_select %p36, 0, %s35
      %s38 = ssub.s32 %s25, %s37
      %s39 = ssub.s32 %s26, %s33
      %s40 = sor.u32 %s38, %s39
      %p41 = scmp.eq.s32.totalorder %s40, 0
      %s43 = sadd.s32 %s42, 1
      %s44 = scalar_select %p41, %s42, %s43
      %p47 = pneg %p41
      %p48 = scmp.eq.s32.totalorder %s18, 1
      %p49 = por %p47, %p48
      %p50 = scmp.ne.s32.totalorder %s42, %s45
      %p51 = scmp.eq.s32.totalorder %s18, 0
      %p52 = por %p50, %p51
      %p53 = scmp.ne.s32.totalorder %s42, %s45
      %p54 = scmp.eq.s32.totalorder %s23, 1
      %p55 = por %p53, %p54
      %p56 = scmp.ne.s32.totalorder %s45, %s46
      %p57 = scmp.eq.s32.totalorder %s23, 0
      %p58 = por %p56, %p57
      %p59 = scmp.ne.s32.totalorder %s45, %s46
      %p60 = scmp.eq.s32.totalorder %s24, 1
      %p61 = por %p59, %p60
      %p63 = scmp.ne.s32.totalorder %s46, %s62
      %p64 = scmp.eq.s32.totalorder %s24, 0
      %p65 = por %p63, %p64
      %s66 = ssub.s32 %s26, %s33
      %p67 = scmp.eq.s32.totalorder %s66, 0
      %s69 = sadd.s32 %s68, 1
      %s70 = scalar_select %p67, %s68, %s69
      %p73 = pneg %p67
      %p74 = scmp.eq.s32.totalorder %s18, 1
      %p75 = por %p73, %p74
      %p76 = scmp.ne.s32.totalorder %s68, %s71
      %p77 = scmp.eq.s32.totalorder %s18, 0
      %p78 = por %p76, %p77
      %p79 = scmp.ne.s32.totalorder %s68, %s71
      %p80 = scmp.eq.s32.totalorder %s23, 1
      %p81 = por %p79, %p80
      %p82 = scmp.ne.s32.totalorder %s71, %s72
      %p83 = scmp.eq.s32.totalorder %s23, 0
      %p84 = por %p82, %p83
      %p85 = scmp.ne.s32.totalorder %s71, %s72
      %p86 = scmp.eq.s32.totalorder %s24, 1
      %p87 = por %p85, %p86
      %p89 = scmp.ne.s32.totalorder %s72, %s88
      %p90 = scmp.eq.s32.totalorder %s24, 0
      %p91 = por %p89, %p90
      %s93 = sadd.s32 %s92, 1
      %p96 = scmp.eq.s32.totalorder %s18, 1
      %p97 = scmp.ne.s32.totalorder %s92, %s94
      %p98 = scmp.eq.s32.totalorder %s18, 0
      %p99 = por %p97, %p98
      %p100 = scmp.ne.s32.totalorder %s92, %s94
      %p101 = scmp.eq.s32.totalorder %s23, 1
      %p102 = por %p100, %p101
      %p103 = scmp.ne.s32.totalorder %s94, %s95
      %p104 = scmp.eq.s32.totalorder %s23, 0
      %p105 = por %p103, %p104
      %p106 = scmp.ne.s32.totalorder %s94, %s95
      %p107 = scmp.eq.s32.totalorder %s24, 1
      %p108 = por %p106, %p107
      %p110 = scmp.ne.s32.totalorder %s95, %s109
      %p111 = scmp.eq.s32.totalorder %s24, 0
      %p112 = por %p110, %p111
      %s114 = sadd.s32 %s113, 1
      %p117 = scmp.eq.s32.totalorder %s18, 1
      %p118 = scmp.ne.s32.totalorder %s113, %s115
      %p119 = scmp.eq.s32.totalorder %s18, 0
      %p120 = por %p118, %p119
      %p121 = scmp.ne.s32.totalorder %s113, %s115
      %p122 = scmp.eq.s32.totalorder %s23, 1
      %p123 = por %p121, %p122
      %p124 = scmp.ne.s32.totalorder %s115, %s116
      %p125 = scmp.eq.s32.totalorder %s23, 0
      %p126 = por %p124, %p125
      %p127 = scmp.ne.s32.totalorder %s115, %s116
      %p128 = scmp.eq.s32.totalorder %s24, 1
      %p129 = por %p127, %p128
      %p131 = scmp.ne.s32.totalorder %s116, %s130
      %p132 = scmp.eq.s32.totalorder %s24, 0
      %p133 = por %p131, %p132
      %s134 = ssub.s32 %s25, %s37
      %p135 = scmp.eq.s32.totalorder %s134, 0
      %s137 = sadd.s32 %s136, 1
      %s138 = scalar_select %p135, %s136, %s137
      %p141 = pneg %p135
      %p142 = scmp.eq.s32.totalorder %s18, 1
      %p143 = por %p141, %p142
      %p144 = scmp.ne.s32.totalorder %s136, %s139
      %p145 = scmp.eq.s32.totalorder %s18, 0
      %p146 = por %p144, %p145
      %p147 = scmp.ne.s32.totalorder %s136, %s139
      %p148 = scmp.eq.s32.totalorder %s23, 1
      %p149 = por %p147, %p148
      %p150 = scmp.ne.s32.totalorder %s139, %s140
      %p151 = scmp.eq.s32.totalorder %s23, 0
      %p152 = por %p150, %p151
      %p153 = scmp.ne.s32.totalorder %s139, %s140
      %p154 = scmp.eq.s32.totalorder %s24, 1
      %p155 = por %p153, %p154
      %p157 = scmp.ne.s32.totalorder %s140, %s156
      %p158 = scmp.eq.s32.totalorder %s24, 0
      %p159 = por %p157, %p158
      %p160 = scmp.le.s32.totalorder 1, %s18
      %p161 = scmp.lt.s32.totalorder %s18, 3
      %p162 = pnand %p160, %p161
      %p163 = pneg %p162
      // Predicated region
      $region9: #{tpu_custom_call.1} parent=5 // pred_check
        _
      $region10: #{tpu_custom_call.1} parent=5 // pred_check_branch
        %165 = sbr.rel (%p162) target = $region12
      $region11: #{tpu_custom_call.1} parent=5 // pred_region
        %s166 = ssub.s32 %s18, 1
        // Predicated region
        $region13: #{tpu_custom_call.1} parent=11 // pred_check
          %p167 = pneg %p84
        $region14: #{tpu_custom_call.1} parent=11 // pred_check_branch
          %169 = sbr.rel (%p167) target = $region16
        $region15: #{tpu_custom_call.1} parent=11 // pred_region
          %s170 = smul.u32 64, %s28
          %s172 = ssub.s32 4096, 4096
          %173 = vsyncadd [#allocation8], %s172
          %s174 = smul.addr %s170, 64
          %s175 = scalar_lea.hbm %s1, %s174
          %s176 = sshll.u32 [#allocation7], 4
          %s177 = int_to_ptr.vmem [resolvable:$true] %s176
          %182 = dma.hbm_to_vmem [thread:$0]  %s175, 4096, %s177, [#allocation8], 64, 64, 4
        $region16: #{tpu_custom_call.1} parent=11 // pred_fallthru
          _
        // Predicated region
        $region17: #{tpu_custom_call.1} parent=11 // pred_check
          %p183 = pneg %p105
        $region18: #{tpu_custom_call.1} parent=11 // pred_check_branch
          %185 = sbr.rel (%p183) target = $region20
        $region19: #{tpu_custom_call.1} parent=11 // pred_region
          _
        $region20: #{tpu_custom_call.1} parent=11 // pred_fallthru
          _
        // Predicated region
        $region21: #{tpu_custom_call.1} parent=11 // pred_check
          %p186 = pneg %p126
        $region22: #{tpu_custom_call.1} parent=11 // pred_check_branch
          %188 = sbr.rel (%p186) target = $region24
        $region23: #{tpu_custom_call.1} parent=11 // pred_region
          _
        $region24: #{tpu_custom_call.1} parent=11 // pred_fallthru
          _
      $region12: #{tpu_custom_call.1} parent=5 // pred_fallthru
        _
      %p189 = scmp.lt.s32.totalorder %s18, 2
      // Predicated region
      $region25: #{tpu_custom_call.1} parent=5 // pred_check
        %p190 = pneg %p189
      $region26: #{tpu_custom_call.1} parent=5 // pred_check_branch
        %192 = sbr.rel (%p190) target = $region28
      $region27: #{tpu_custom_call.1} parent=5 // pred_region
        // Predicated region
        $region29: #{tpu_custom_call.1} parent=27 // pred_check
          %p193 = pneg %p52
        $region30: #{tpu_custom_call.1} parent=27 // pred_check_branch
          %195 = sbr.rel (%p193) target = $region32
        $region31: #{tpu_custom_call.1} parent=27 // pred_region
          %s196 = sand.u32 %s42, 1
          %s197 = scalar_lea.sflag [#allocation5], %s196
          %s198 = sand.u32 %s42, 1
          %s199 = smul.addr %s198, 16
          %s200 = scalar_lea.vmem [#allocation4], %s199
          %s201 = smul.u32 4, %s26
          %s203 = ssub.s32 256, 256
          %204 = vsyncadd %s197, %s203
          %s205 = smul.addr %s25, 4
          %s206 = sadd.s32 %s201, %s205
          %s207 = smul.addr %s206, 64
          %s208 = scalar_lea.hbm %s0, %s207
          %s210 = sshll.u32 %s200, 4
          %s211 = int_to_ptr.vmem [resolvable:$true] %s210
          %213 = dma.hbm_to_vmem [thread:$0]  %s208, 256, %s211, %s197
        $region32: #{tpu_custom_call.1} parent=27 // pred_fallthru
          _
      $region28: #{tpu_custom_call.1} parent=5 // pred_fallthru
        _
      %p214 = scmp.le.s32.totalorder 1, %s18
      %p215 = scmp.lt.s32.totalorder %s18, 3
      %p216 = pnand %p214, %p215
      %p217 = pneg %p216
      // Predicated region
      $region33: #{tpu_custom_call.1} parent=5 // pred_check
        _
      $region34: #{tpu_custom_call.1} parent=5 // pred_check_branch
        %219 = sbr.rel (%p216) target = $region36
      $region35: #{tpu_custom_call.1} parent=5 // pred_region
        %s220 = ssub.s32 %s18, 1
        %s221 = sand.u32 %s45, 1
        %s222 = scalar_lea.sflag [#allocation5], %s221
        %s223 = sand.u32 %s45, 1
        %s224 = smul.addr %s223, 16
        %s225 = scalar_lea.vmem [#allocation4], %s224
        // Predicated region
        $region37: #{tpu_custom_call.1} parent=35 // pred_check
          %p226 = pneg %p58
        $region38: #{tpu_custom_call.1} parent=35 // pred_check_branch
          %228 = sbr.rel (%p226) target = $region40
        $region39: #{tpu_custom_call.1} parent=35 // pred_region
          %229 = dma.done %s222, 256
        $region40: #{tpu_custom_call.1} parent=35 // pred_fallthru
          _
        // Predicated region
        $region41: #{tpu_custom_call.1} parent=35 // pred_check
          %p230 = pneg %p84
        $region42: #{tpu_custom_call.1} parent=35 // pred_check_branch
          %232 = sbr.rel (%p230) target = $region44
        $region43: #{tpu_custom_call.1} parent=35 // pred_region
          %233 = dma.done [#allocation8], 4096
        $region44: #{tpu_custom_call.1} parent=35 // pred_fallthru
          _
        %s234 = sand.u32 %s45, 1
        %s235 = scalar_lea.sflag [#allocation5], %s234
        %s236 = sand.u32 %s45, 1
        %s237 = smul.addr %s236, 16
        %s238 = scalar_lea.vmem [#allocation4], %s237
        %p239 = pneg %p58
        %p240 = pneg %p55
        %p241 = pneg %p84
        %p242 = pneg %p81
        %p243 = pneg %p105
        %p244 = pneg %p102
        %p245 = pneg %p126
        %p246 = pneg %p123
        %p247 = pneg %p152
        %p248 = pneg %p149
        %s249 = sand.u32 %s139, 1
        %s250 = scalar_lea.sflag [#allocation6], %s249
        %s251 = sand.u32 %s139, 1
        %s252 = smul.addr %s251, 8
        %s253 = scalar_lea.vmem [#allocation9], %s252
        %s254 = smul.u32 4, %s28
        %s255 = smul.u32 64, %s28
        %p257 = scmp.eq.s32.totalorder %s28, 0
        // Predicated region
        $region45: #{tpu_custom_call.1} parent=35 // pred_check
          %p258 = pneg %p257
        $region46: #{tpu_custom_call.1} parent=35 // pred_check_branch
          %260 = sbr.rel (%p258) target = $region48
        $region47: #{tpu_custom_call.1} parent=35 // pred_region
          %261 = vst [vmem:[#allocation2] sm:$0xff] 0.0
        $region48: #{tpu_custom_call.1} parent=35 // pred_fallthru
          _
        %v262 = vld [vmem:[#allocation2] sm:$0xff]
        %v263 = vld [vmem:[%s225] sm:$0xff]
        %v264 = vld [vmem:[%s225 + $0x8] sm:$0xff]
        %v265 = vld [vmem:[#allocation7] sm:$0xf]
        %v266 = vld [vmem:[#allocation7 + $0x4] sm:$0xf]
        %v267 = vld [vmem:[#allocation7 + $0x8] sm:$0xf]
        %v268 = vld [vmem:[#allocation7 + $0xc] sm:$0xf]
        %v269 = vld [vmem:[#allocation7 + $0x10] sm:$0xf]
        %v270 = vld [vmem:[#allocation7 + $0x14] sm:$0xf]
        %v271 = vld [vmem:[#allocation7 + $0x18] sm:$0xf]
        %v272 = vld [vmem:[#allocation7 + $0x1c] sm:$0xf]
        %v273 = vld [vmem:[#allocation7 + $0x20] sm:$0xf]
        %v274 = vld [vmem:[#allocation7 + $0x24] sm:$0xf]
        %v275 = vld [vmem:[#allocation7 + $0x28] sm:$0xf]
        %v276 = vld [vmem:[#allocation7 + $0x2c] sm:$0xf]
        %v277 = vld [vmem:[#allocation7 + $0x30] sm:$0xf]
        %v278 = vld [vmem:[#allocation7 + $0x34] sm:$0xf]
        %v279 = vld [vmem:[#allocation7 + $0x38] sm:$0xf]
        %v280 = vld [vmem:[#allocation7 + $0x3c] sm:$0xf]
        %v281 = vld [vmem:[#allocation7 + $0x40] sm:$0xf]
        %v282 = vld [vmem:[#allocation7 + $0x44] sm:$0xf]
        %v283 = vld [vmem:[#allocation7 + $0x48] sm:$0xf]
        %v284 = vld [vmem:[#allocation7 + $0x4c] sm:$0xf]
        %v285 = vld [vmem:[#allocation7 + $0x50] sm:$0xf]
        %v286 = vld [vmem:[#allocation7 + $0x54] sm:$0xf]
        %v287 = vld [vmem:[#allocation7 + $0x58] sm:$0xf]
        %v288 = vld [vmem:[#allocation7 + $0x5c] sm:$0xf]
        %v289 = vld [vmem:[#allocation7 + $0x60] sm:$0xf]
        %v290 = vld [vmem:[#allocation7 + $0x64] sm:$0xf]
        %v291 = vld [vmem:[#allocation7 + $0x68] sm:$0xf]
        %v292 = vld [vmem:[#allocation7 + $0x6c] sm:$0xf]
        %v293 = vld [vmem:[#allocation7 + $0x70] sm:$0xf]
        %v294 = vld [vmem:[#allocation7 + $0x74] sm:$0xf]
        %v295 = vld [vmem:[#allocation7 + $0x78] sm:$0xf]
        %v296 = vld [vmem:[#allocation7 + $0x7c] sm:$0xf]
        %v297 = vld [vmem:[#allocation7 + $0x80] sm:$0xf]
        %v298 = vld [vmem:[#allocation7 + $0x84] sm:$0xf]
        %v299 = vld [vmem:[#allocation7 + $0x88] sm:$0xf]
        %v300 = vld [vmem:[#allocation7 + $0x8c] sm:$0xf]
        %v301 = vld [vmem:[#allocation7 + $0x90] sm:$0xf]
        %v302 = vld [vmem:[#allocation7 + $0x94] sm:$0xf]
        %v303 = vld [vmem:[#allocation7 + $0x98] sm:$0xf]
        %v304 = vld [vmem:[#allocation7 + $0x9c] sm:$0xf]
        %v305 = vld [vmem:[#allocation7 + $0xa0] sm:$0xf]
        %v306 = vld [vmem:[#allocation7 + $0xa4] sm:$0xf]
        %v307 = vld [vmem:[#allocation7 + $0xa8] sm:$0xf]
        %v308 = vld [vmem:[#allocation7 + $0xac] sm:$0xf]
        %v309 = vld [vmem:[#allocation7 + $0xb0] sm:$0xf]
        %v310 = vld [vmem:[#allocation7 + $0xb4] sm:$0xf]
        %v311 = vld [vmem:[#allocation7 + $0xb8] sm:$0xf]
        %v312 = vld [vmem:[#allocation7 + $0xbc] sm:$0xf]
        %v313 = vld [vmem:[#allocation7 + $0xc0] sm:$0xf]
        %v314 = vld [vmem:[#allocation7 + $0xc4] sm:$0xf]
        %v315 = vld [vmem:[#allocation7 + $0xc8] sm:$0xf]
        %v316 = vld [vmem:[#allocation7 + $0xcc] sm:$0xf]
        %v317 = vld [vmem:[#allocation7 + $0xd0] sm:$0xf]
        %v318 = vld [vmem:[#allocation7 + $0xd4] sm:$0xf]
        %v319 = vld [vmem:[#allocation7 + $0xd8] sm:$0xf]
        %v320 = vld [vmem:[#allocation7 + $0xdc] sm:$0xf]
        %v321 = vld [vmem:[#allocation7 + $0xe0] sm:$0xf]
        %v322 = vld [vmem:[#allocation7 + $0xe4] sm:$0xf]
        %v323 = vld [vmem:[#allocation7 + $0xe8] sm:$0xf]
        %v324 = vld [vmem:[#allocation7 + $0xec] sm:$0xf]
        %v325 = vld [vmem:[#allocation7 + $0xf0] sm:$0xf]
        %v326 = vld [vmem:[#allocation7 + $0xf4] sm:$0xf]
        %v327 = vld [vmem:[#allocation7 + $0xf8] sm:$0xf]
        %v328 = vld [vmem:[#allocation7 + $0xfc] sm:$0xf]
        %v331 = vunpack.c.l.b16 %v263
        %v332 = vunpack.c.h.b16 %v263
        %v333 = vunpack.c.l.b16 %v264
        %v334 = vunpack.c.h.b16 %v264
        %v335 = vpack.c.b16 %v331, %v331
        %v336 = vpack.c.b16 %v332, %v332
        %v337 = vpack.c.b16 %v333, %v333
        %v338 = vpack.c.b16 %v334, %v334
        %v407 = vunpack.c.l.b16 %v265
        %v408 = vunpack.c.l.b16 %v266
        %v409 = vunpack.c.l.b16 %v267
        %v410 = vunpack.c.l.b16 %v268
        %v411 = vunpack.c.l.b16 %v269
        %v412 = vunpack.c.l.b16 %v270
        %v413 = vunpack.c.l.b16 %v271
        %v414 = vunpack.c.l.b16 %v272
        %v415 = vunpack.c.l.b16 %v273
        %v416 = vunpack.c.l.b16 %v274
        %v417 = vunpack.c.l.b16 %v275
        %v418 = vunpack.c.l.b16 %v276
        %v419 = vunpack.c.l.b16 %v277
        %v420 = vunpack.c.l.b16 %v278
        %v421 = vunpack.c.l.b16 %v279
        %v422 = vunpack.c.l.b16 %v280
        %v423 = vunpack.c.l.b16 %v281
        %v424 = vunpack.c.l.b16 %v282
        %v425 = vunpack.c.l.b16 %v283
        %v426 = vunpack.c.l.b16 %v284
        %v427 = vunpack.c.l.b16 %v285
        %v428 = vunpack.c.l.b16 %v286
        %v429 = vunpack.c.l.b16 %v287
        %v430 = vunpack.c.l.b16 %v288
        %v431 = vunpack.c.l.b16 %v289
        %v432 = vunpack.c.l.b16 %v290
        %v433 = vunpack.c.l.b16 %v291
        %v434 = vunpack.c.l.b16 %v292
        %v435 = vunpack.c.l.b16 %v293
        %v436 = vunpack.c.l.b16 %v294
        %v437 = vunpack.c.l.b16 %v295
        %v438 = vunpack.c.l.b16 %v296
        %v439 = vunpack.c.l.b16 %v297
        %v440 = vunpack.c.l.b16 %v298
        %v441 = vunpack.c.l.b16 %v299
        %v442 = vunpack.c.l.b16 %v300
        %v443 = vunpack.c.l.b16 %v301
        %v444 = vunpack.c.l.b16 %v302
        %v445 = vunpack.c.l.b16 %v303
        %v446 = vunpack.c.l.b16 %v304
        %v447 = vunpack.c.l.b16 %v305
        %v448 = vunpack.c.l.b16 %v306
        %v449 = vunpack.c.l.b16 %v307
        %v450 = vunpack.c.l.b16 %v308
        %v451 = vunpack.c.l.b16 %v309
        %v452 = vunpack.c.l.b16 %v310
        %v453 = vunpack.c.l.b16 %v311
        %v454 = vunpack.c.l.b16 %v312
        %v455 = vunpack.c.l.b16 %v313
        %v456 = vunpack.c.l.b16 %v314
        %v457 = vunpack.c.l.b16 %v315
        %v458 = vunpack.c.l.b16 %v316
        %v459 = vunpack.c.l.b16 %v317
        %v460 = vunpack.c.l.b16 %v318
        %v461 = vunpack.c.l.b16 %v319
        %v462 = vunpack.c.l.b16 %v320
        %v463 = vunpack.c.l.b16 %v321
        %v464 = vunpack.c.l.b16 %v322
        %v465 = vunpack.c.l.b16 %v323
        %v466 = vunpack.c.l.b16 %v324
        %v467 = vunpack.c.l.b16 %v325
        %v468 = vunpack.c.l.b16 %v326
        %v469 = vunpack.c.l.b16 %v327
        %v470 = vunpack.c.l.b16 %v328
        %v471 = vpack.c.b16 %v408, %v407
        %v472 = vpack.c.b16 %v410, %v409
        %v473 = vpack.c.b16 %v412, %v411
        %v474 = vpack.c.b16 %v414, %v413
        %v475 = vpack.c.b16 %v416, %v415
        %v476 = vpack.c.b16 %v418, %v417
        %v477 = vpack.c.b16 %v420, %v419
        %v478 = vpack.c.b16 %v422, %v421
        %v479 = vpack.c.b16 %v424, %v423
        %v480 = vpack.c.b16 %v426, %v425
        %v481 = vpack.c.b16 %v428, %v427
        %v482 = vpack.c.b16 %v430, %v429
        %v483 = vpack.c.b16 %v432, %v431
        %v484 = vpack.c.b16 %v434, %v433
        %v485 = vpack.c.b16 %v436, %v435
        %v486 = vpack.c.b16 %v438, %v437
        %v487 = vpack.c.b16 %v440, %v439
        %v488 = vpack.c.b16 %v442, %v441
        %v489 = vpack.c.b16 %v444, %v443
        %v490 = vpack.c.b16 %v446, %v445
        %v491 = vpack.c.b16 %v448, %v447
        %v492 = vpack.c.b16 %v450, %v449
        %v493 = vpack.c.b16 %v452, %v451
        %v494 = vpack.c.b16 %v454, %v453
        %v495 = vpack.c.b16 %v456, %v455
        %v496 = vpack.c.b16 %v458, %v457
        %v497 = vpack.c.b16 %v460, %v459
        %v498 = vpack.c.b16 %v462, %v461
        %v499 = vpack.c.b16 %v464, %v463
        %v500 = vpack.c.b16 %v466, %v465
        %v501 = vpack.c.b16 %v468, %v467
        %v502 = vpack.c.b16 %v470, %v469
        %535 = vmatprep.subr.bf16.mxu0 0
        %536 = vmatpush1.bf16.msra.mxu0 %v471
        %537 = vmatprep.subr.bf16.mxu0 0
        %538 = vmatpush1.bf16.msra.mxu0 %v472
        %539 = vmatprep.subr.bf16.mxu0 0
        %540 = vmatpush1.bf16.msra.mxu0 %v473
        %541 = vmatprep.subr.bf16.mxu0 0
        %542 = vmatpush1.bf16.msra.mxu0 %v474
        %543 = vmatprep.subr.bf16.mxu0 0
        %544 = vmatpush1.bf16.msra.mxu0 %v475
        %545 = vmatprep.subr.bf16.mxu0 0
        %546 = vmatpush1.bf16.msra.mxu0 %v476
        %547 = vmatprep.subr.bf16.mxu0 0
        %548 = vmatpush1.bf16.msra.mxu0 %v477
        %549 = vmatprep.subr.bf16.mxu0 0
        %550 = vmatpush1.bf16.msra.mxu0 %v478
        %551 = vmatprep.subr.bf16.mxu0 0
        %552 = vmatpush1.bf16.msra.mxu0 %v479
        %553 = vmatprep.subr.bf16.mxu0 0
        %554 = vmatpush1.bf16.msra.mxu0 %v480
        %555 = vmatprep.subr.bf16.mxu0 0
        %556 = vmatpush1.bf16.msra.mxu0 %v481
        %557 = vmatprep.subr.bf16.mxu0 0
        %558 = vmatpush1.bf16.msra.mxu0 %v482
        %559 = vmatprep.subr.bf16.mxu0 0
        %560 = vmatpush1.bf16.msra.mxu0 %v483
        %561 = vmatprep.subr.bf16.mxu0 0
        %562 = vmatpush1.bf16.msra.mxu0 %v484
        %563 = vmatprep.subr.bf16.mxu0 0
        %564 = vmatpush1.bf16.msra.mxu0 %v485
        %565 = vmatprep.subr.bf16.mxu0 0
        %566 = vmatpush1.bf16.msra.mxu0 %v486
        %567 = vmatprep.mubr.bf16.mxu0 %v336
        %568 = vmatmul.mubr.bf16.gmra.mrb[0].mxu0 %v335
        %v569 = vpop.f32.mrb[0].mxu0
        %v570 = vadd.f32 0.0, %v569
        %v571 = vpop.f32.mrb[0].mxu0
        %v572 = vpop.f32.mrb[0].mxu0
        %v573 = vpop.f32.mrb[0].mxu0
        %574 = vdwg.mxu0
        %575 = vmatprep.subr.bf16.mxu0 0
        %576 = vmatpush1.bf16.msra.mxu0 %v487
        %577 = vmatprep.subr.bf16.mxu0 0
        %578 = vmatpush1.bf16.msra.mxu0 %v488
        %579 = vmatprep.subr.bf16.mxu0 0
        %580 = vmatpush1.bf16.msra.mxu0 %v489
        %581 = vmatprep.subr.bf16.mxu0 0
        %582 = vmatpush1.bf16.msra.mxu0 %v490
        %583 = vmatprep.subr.bf16.mxu0 0
        %584 = vmatpush1.bf16.msra.mxu0 %v491
        %585 = vmatprep.subr.bf16.mxu0 0
        %586 = vmatpush1.bf16.msra.mxu0 %v492
        %587 = vmatprep.subr.bf16.mxu0 0
        %588 = vmatpush1.bf16.msra.mxu0 %v493
        %589 = vmatprep.subr.bf16.mxu0 0
        %590 = vmatpush1.bf16.msra.mxu0 %v494
        %591 = vmatprep.subr.bf16.mxu0 0
        %592 = vmatpush1.bf16.msra.mxu0 %v495
        %593 = vmatprep.subr.bf16.mxu0 0
        %594 = vmatpush1.bf16.msra.mxu0 %v496
        %595 = vmatprep.subr.bf16.mxu0 0
        %596 = vmatpush1.bf16.msra.mxu0 %v497
        %597 = vmatprep.subr.bf16.mxu0 0
        %598 = vmatpush1.bf16.msra.mxu0 %v498
        %599 = vmatprep.subr.bf16.mxu0 0
        %600 = vmatpush1.bf16.msra.mxu0 %v499
        %601 = vmatprep.subr.bf16.mxu0 0
        %602 = vmatpush1.bf16.msra.mxu0 %v500
        %603 = vmatprep.subr.bf16.mxu0 0
        %604 = vmatpush1.bf16.msra.mxu0 %v501
        %605 = vmatprep.subr.bf16.mxu0 0
        %606 = vmatpush1.bf16.msra.mxu0 %v502
        %607 = vmatprep.mubr.bf16.mxu0 %v338
        %608 = vmatmul.mubr.bf16.gmra.mrb[0].mxu0 %v337
        %v609 = vpop.f32.mrb[0].mxu0
        %v610 = vadd.f32 %v570, %v609
        %v611 = vpop.f32.mrb[0].mxu0
        %v612 = vpop.f32.mrb[0].mxu0
        %v613 = vpop.f32.mrb[0].mxu0
        %614 = vdwg.mxu0
        %v615 = vadd.f32 %v262, %v610
        %616 = vst [vmem:[#allocation2] sm:$0xff] %v615
        // Predicated region
        $region49: #{tpu_custom_call.1} parent=35 // pred_check
          %p617 = pneg %p257
        $region50: #{tpu_custom_call.1} parent=35 // pred_check_branch
          %619 = sbr.rel (%p617) target = $region52
        $region51: #{tpu_custom_call.1} parent=35 // pred_region
          %v620 = vld [vmem:[#allocation2] sm:$0xff]
          %v621 = vld [vmem:[%s2] sm:$0x1]
          %v623 = vlaneseq
          %v624 = vshrl.u32 %v623, 7
          %v625 = vsub.s32 0, %v624
          %v626 = vrot.slane %v621, %v625
          %v628 = vadd.f32 %v620, %v626
          %s629 = sld [smem:[#allocation3]]
          %vm630 = vcmp.ge.f32.partialorder %v628, 0.0
          %v631 = vstv %s629
          %v632 = vmul.f32 %v631, %v628
          %v633 = vsel %vm630, %v628, %v632
          %634 = vst [vmem:[%s253] sm:$0xff] %v633
        $region52: #{tpu_custom_call.1} parent=35 // pred_fallthru
          _
        %s635 = sand.u32 %s139, 1
        %s636 = scalar_lea.sflag [#allocation6], %s635
        %s637 = sand.u32 %s139, 1
        %s638 = smul.addr %s637, 8
        %s639 = scalar_lea.vmem [#allocation9], %s638
        // Predicated region
        $region53: #{tpu_custom_call.1} parent=35 // pred_check
          %p640 = pneg %p149
        $region54: #{tpu_custom_call.1} parent=35 // pred_check_branch
          %642 = sbr.rel (%p640) target = $region56
        $region55: #{tpu_custom_call.1} parent=35 // pred_region
          %s644 = ssub.s32 128, 128
          %645 = vsyncadd %s636, %s644
          %s646 = smul.addr %s27, 128
          %s647 = scalar_lea.hbm %s4, %s646
          %s649 = sshll.u32 %s639, 4
          %s650 = int_to_ptr.vmem [resolvable:$true] %s649
          %652 = dma.vmem_to_hbm [thread:$0]  %s650, 128, %s647, %s636
        $region56: #{tpu_custom_call.1} parent=35 // pred_fallthru
          _
      $region36: #{tpu_custom_call.1} parent=5 // pred_fallthru
        _
      %p653 = scmp.le.s32.totalorder 2, %s18
      // Predicated region
      $region57: #{tpu_custom_call.1} parent=5 // pred_check
        %p654 = pneg %p653
      $region58: #{tpu_custom_call.1} parent=5 // pred_check_branch
        %656 = sbr.rel (%p654) target = $region60
      $region59: #{tpu_custom_call.1} parent=5 // pred_region
        %s657 = ssub.s32 %s18, 2
        // Predicated region
        $region61: #{tpu_custom_call.1} parent=59 // pred_check
          %p658 = pneg %p155
        $region62: #{tpu_custom_call.1} parent=59 // pred_check_branch
          %660 = sbr.rel (%p658) target = $region64
        $region63: #{tpu_custom_call.1} parent=59 // pred_region
          %s661 = sand.u32 %s140, 1
          %s662 = scalar_lea.sflag [#allocation6], %s661
          %s663 = sand.u32 %s140, 1
          %s664 = smul.addr %s663, 8
          %s665 = scalar_lea.vmem [#allocation9], %s664
          %666 = dma.done %s662, 128
        $region64: #{tpu_custom_call.1} parent=59 // pred_fallthru
          _
      $region60: #{tpu_custom_call.1} parent=5 // pred_fallthru
        _
    $region6: #{tpu_custom_call.1} parent=1 // loop_footer
      %s22 = sadd.s32 1, %s18
    $region7: #{tpu_custom_call.1} parent=1 // loop_footer_branch
      %17 = sbr.rel target = $region3
    $region8: #{tpu_custom_call.1} parent=1 // loop_exit
      _
    %667 = vsyncpa [#allocation5], 1
    %s668 = scalar_lea.sflag [#allocation5], 1
    %669 = vsyncpa %s668, 1
    %670 = vsyncpa [#allocation8], 1
    %671 = vsyncpa [#allocation6], 1
    %s672 = scalar_lea.sflag [#allocation6], 1
    %673 = vsyncpa %s672, 1

</llo_original>
